<compile_context>
chip_gen: v7x
topology: tpu7x:2x2x1
jax: 0.10.0
libtpu: 0.0.40
codegen_flags: <defaults>
</compile_context>

<pallas_src>
import jax
import jax.numpy as jnp
import numpy as np
from jax import lax
from jax.experimental import pallas as pl
from jax.experimental.pallas import tpu as pltpu


# ----------------------------------------------------------------------------
# Kernel
# ----------------------------------------------------------------------------

def _coam_kernel(x1_ref, x2_ref, gamma_ref, o_ref):
    """x1_ref/x2_ref: (1, C, P) native dtype; gamma_ref: (1,) f32 in SMEM; o_ref: (1, RB, P)."""
    C = x1_ref.shape[1]
    rb = o_ref.shape[1]                                # rows of C owned by this grid step
    row0 = pl.multiple_of(pl.program_id(1) * rb, rb)

    k = x2_ref[0]                                      # (C, P) keys   (torch x2)
    v = x1_ref[0]                                      # (C, P) values (torch x1)

    if rb == C:                                        # static: full-row block, no slicing
        q, resid = k, v
    else:
        q = x2_ref[0, pl.ds(row0, rb), :]              # (RB, P) query rows
        resid = x1_ref[0, pl.ds(row0, rb), :]          # (RB, P) residual rows

    # energy[c1, c2] = sum_p q[c1, p] * k[c2, p]  -> (RB, C), f32 accumulation.
    energy = lax.dot_general(q, k, (((1,), (1,)), ((), ())),
                             preferred_element_type=jnp.float32)

    # torch's rowmax(E) - E followed by softmax's internal rowmax subtraction compose to
    # rowmin(E) - E: one reduction, logits <= 0 (stable), identical softmax output.
    logits = jnp.min(energy, axis=-1, keepdims=True) - energy
    p = jnp.exp(logits)
    inv_denom = pl.reciprocal(jnp.sum(p, axis=-1, keepdims=True), approx=True)
    # Fold gamma into the (RB, C) attention tile (scale in f32, then cast for the MXU).
    attn = (p * inv_denom) * gamma_ref[0]

    # out[c1, p] = sum_c2 attn[c1, c2] * x1[c2, p]  -- native-dtype operands, f32 acc.
    out = jnp.dot(attn.astype(v.dtype), v, preferred_element_type=jnp.float32)

    # Epilogue is a pure add (gamma already applied above).
    o_ref[0] = (out + resid.astype(jnp.float32)).astype(o_ref.dtype)


# ----------------------------------------------------------------------------
# Wrapper
# ----------------------------------------------------------------------------

def coam_forward(x1, x2, gamma, *, row_blocks=None):
    """CoAM_Module.forward.  x1, x2: (B, C, H, W); gamma: shape-(1,) scalar parameter."""
    assert x1.shape == x2.shape, "x1 / x2 must have identical shapes"
    assert x1.dtype == x2.dtype, "x1 / x2 must have identical dtypes"
    B, C, H, W = x1.shape
    P = H * W

    # Free reshapes: lane (last) dim stays H*W, no wrapper dtype casts (native I/O).
    x1r = x1.reshape(B, C, P)
    x2r = x2.reshape(B, C, P)
    gamma = jnp.asarray(gamma, jnp.float32).reshape(1)

    if row_blocks is None:
        # Even B: batch steps already keep both v7x cores busy.  Odd/1 B: split the C
        # rows in two so the second core gets independent work.
        row_blocks = 1 if B % 2 == 0 else 2
    if C % row_blocks != 0 or (C // row_blocks) % 8 != 0:
        row_blocks = 1                                 # keep row blocks sublane-aligned
    RB = C // row_blocks

    out = pl.pallas_call(
        _coam_kernel,
        out_shape=jax.ShapeDtypeStruct((B, C, P), x1.dtype),
        grid=(B, row_blocks),
        in_specs=[
            pl.BlockSpec((1, C, P), lambda b, r: (b, 0, 0)),    # x1: values + residual
            pl.BlockSpec((1, C, P), lambda b, r: (b, 0, 0)),    # x2: queries + keys
            pl.BlockSpec(memory_space=pltpu.MemorySpace.SMEM),  # gamma scalar
        ],
        out_specs=pl.BlockSpec((1, RB, P), lambda b, r: (b, r, 0)),
        compiler_params=pltpu.CompilerParams(
            dimension_semantics=("parallel", "parallel")),
    )(x1r, x2r, gamma)
    return out.reshape(B, C, H, W)


# ----------------------------------------------------------------------------
# Pure-JAX reference (mirrors the PyTorch module, f32 / highest precision)
# ----------------------------------------------------------------------------

def coam_reference(x1, x2, gamma):
    B, C, H, W = x1.shape
    q = x2.astype(jnp.float32).reshape(B, C, H * W)
    v = x1.astype(jnp.float32).reshape(B, C, H * W)
    energy = jnp.einsum("bcp,bdp->bcd", q, q, precision=lax.Precision.HIGHEST)
    energy_new = jnp.max(energy, axis=-1, keepdims=True) - energy
    attention = jax.nn.softmax(energy_new, axis=-1)
    out = jnp.einsum("bcd,bdp->bcp", attention, v, precision=lax.Precision.HIGHEST)
    return (jnp.asarray(gamma, jnp.float32).reshape(1, 1, 1) * out + v).reshape(B, C, H, W)


# ----------------------------------------------------------------------------
# Demo / self-check
# ----------------------------------------------------------------------------

if __name__ == "__main__":
    key = jax.random.PRNGKey(0)
    k1, k2 = jax.random.split(key)

    # CoAM_Module is instantiated with in_dim=128 in CSANet; 16x16 spatial, batch 2.
    B, C, H, W = 2, 128, 16, 16
    x1 = jax.random.normal(k1, (B, C, H, W), jnp.float32)
    x2 = jax.random.normal(k2, (B, C, H, W), jnp.float32)

    fwd = jax.jit(coam_forward)

    # 1) The module zero-initializes gamma: output must equal the residual x1 exactly.
    gamma0 = jnp.zeros((1,), jnp.float32)
    out0 = jax.block_until_ready(fwd(x1, x2, gamma0))
    np.testing.assert_allclose(np.asarray(out0), np.asarray(x1), atol=1e-6, rtol=0)

    # 2) Non-zero gamma exercises the attention path (f32 inputs, even B -> grid=(B, 1)).
    gamma = jnp.full((1,), 0.25, jnp.float32)
    out = jax.block_until_ready(fwd(x1, x2, gamma))
    ref = jax.block_until_ready(coam_reference(x1, x2, gamma))
    assert out.shape == (B, C, H, W) and out.dtype == x1.dtype
    assert bool(jnp.all(jnp.isfinite(out)))
    np.testing.assert_allclose(np.asarray(out), np.asarray(ref), atol=5e-2, rtol=5e-2)

    # 3) Odd batch (B=1) exercises the row-split grid (row_blocks=2, both v7x cores busy).
    out1 = jax.block_until_ready(fwd(x1[:1], x2[:1], gamma))
    ref1 = jax.block_until_ready(coam_reference(x1[:1], x2[:1], gamma))
    np.testing.assert_allclose(np.asarray(out1), np.asarray(ref1), atol=5e-2, rtol=5e-2)

    # 4) Native bf16 I/O path (no wrapper casts, bf16 in -> bf16 out).
    x1b, x2b = x1.astype(jnp.bfloat16), x2.astype(jnp.bfloat16)
    outb = jax.block_until_ready(fwd(x1b, x2b, gamma))
    refb = jax.block_until_ready(coam_reference(x1b, x2b, gamma))
    assert outb.dtype == jnp.bfloat16
    np.testing.assert_allclose(np.asarray(outb.astype(jnp.float32)), np.asarray(refb),
                               atol=5e-2, rtol=5e-2)

    print("KERNEL_OK")
</pallas_src>

<mosaic_0001>
module attributes {stable_mosaic.version = 11 : i64} {
  func.func @_coam_kernel(%arg0: i32, %arg1: i32, %arg2: memref<1x128x256xf32, #tpu.memory_space<vmem>>, %arg3: memref<1x128x256xf32, #tpu.memory_space<vmem>>, %arg4: memref<1xf32, #tpu.memory_space<smem>>, %arg5: memref<1x128x256xf32, #tpu.memory_space<vmem>>) attributes {dimension_semantics = [#tpu.dimension_semantics<parallel>, #tpu.dimension_semantics<parallel>], iteration_bounds = array<i64: 2, 1>, scalar_prefetch = 0 : i64, scratch_operands = 0 : i64, tpu.core_type = #tpu.core_type<tc>, window_params = [{transform_indices = @transform_0, window_bounds = array<i64: 1, 128, 256>}, {transform_indices = @transform_1, window_bounds = array<i64: 1, 128, 256>}, {transform_indices = @transform_2, window_bounds = array<i64: 1>}, {transform_indices = @transform_3, window_bounds = array<i64: 1, 128, 256>}]} {
    %c0 = arith.constant 0 : index
    %c0_0 = arith.constant 0 : index
    %c0_1 = arith.constant 0 : index
    %0 = vector.load %arg3[%c0, %c0_0, %c0_1] : memref<1x128x256xf32, #tpu.memory_space<vmem>>, vector<1x128x256xf32>
    %1 = vector.shape_cast %0 : vector<1x128x256xf32> to vector<128x256xf32>
    %c0_2 = arith.constant 0 : index
    %c0_3 = arith.constant 0 : index
    %c0_4 = arith.constant 0 : index
    %2 = vector.load %arg2[%c0_2, %c0_3, %c0_4] : memref<1x128x256xf32, #tpu.memory_space<vmem>>, vector<1x128x256xf32>
    %3 = vector.shape_cast %2 : vector<1x128x256xf32> to vector<128x256xf32>
    %cst = arith.constant dense<0.000000e+00> : vector<128x128xf32>
    %4 = tpu.matmul %1, %1, %cst {dimension_numbers = #tpu.dot_dimension_numbers<[1], [1], [0], [0], [0, 0, 1, 0], [], []>} : vector<128x256xf32>, vector<128x256xf32>, vector<128x128xf32> -> vector<128x128xf32>
    %cst_5 = arith.constant dense<0x7F800000> : vector<128xf32>
    %5 = vector.multi_reduction <minimumf>, %4, %cst_5 [1] : vector<128x128xf32> to vector<128xf32>
    %6 = vector.shape_cast %5 : vector<128xf32> to vector<128x1xf32>
    %7 = vector.broadcast %6 : vector<128x1xf32> to vector<128x128xf32>
    %8 = arith.subf %7, %4 : vector<128x128xf32>
    %9 = math.exp %8 : vector<128x128xf32>
    %cst_6 = arith.constant dense<0.000000e+00> : vector<128xf32>
    %10 = vector.multi_reduction <add>, %9, %cst_6 [1] : vector<128x128xf32> to vector<128xf32>
    %11 = vector.shape_cast %10 : vector<128xf32> to vector<128x1xf32>
    %12 = tpu.reciprocal %11 {approx = true} : vector<128x1xf32> -> vector<128x1xf32>
    %13 = vector.broadcast %12 : vector<128x1xf32> to vector<128x128xf32>
    %14 = arith.mulf %9, %13 : vector<128x128xf32>
    %c0_7 = arith.constant 0 : index
    %15 = memref.load %arg4[%c0_7] : memref<1xf32, #tpu.memory_space<smem>>
    %16 = vector.broadcast %15 : f32 to vector<128x128xf32>
    %17 = arith.mulf %14, %16 : vector<128x128xf32>
    %cst_8 = arith.constant dense<0.000000e+00> : vector<128x256xf32>
    %18 = tpu.matmul %17, %3, %cst_8 {dimension_numbers = #tpu.dot_dimension_numbers<[1], [0], [0], [1], [0, 0, 1, 1], [], []>} : vector<128x128xf32>, vector<128x256xf32>, vector<128x256xf32> -> vector<128x256xf32>
    %19 = arith.addf %18, %3 : vector<128x256xf32>
    %c0_9 = arith.constant 0 : index
    %c0_10 = arith.constant 0 : index
    %c0_11 = arith.constant 0 : index
    %20 = vector.load %arg5[%c0_9, %c0_10, %c0_11] : memref<1x128x256xf32, #tpu.memory_space<vmem>>, vector<1x128x256xf32>
    %21 = vector.shape_cast %20 : vector<1x128x256xf32> to vector<128x256xf32>
    %22 = vector.shape_cast %19 : vector<128x256xf32> to vector<1x128x256xf32>
    tpu.vector_store %arg5[%c0_9, %c0_10, %c0_11], %22 {strides = array<i32>} : memref<1x128x256xf32, #tpu.memory_space<vmem>>, vector<1x128x256xf32>,
    return
  }
  func.func @transform_0(%arg0: i32, %arg1: i32) -> (i32, i32, i32) {
    %c0_i32 = arith.constant 0 : i32
    %c0_i32_0 = arith.constant 0 : i32
    %c0_i32_1 = arith.constant 0 : i32
    return %arg0, %c0_i32, %c0_i32_0 : i32, i32, i32
  }
  func.func @transform_1(%arg0: i32, %arg1: i32) -> (i32, i32, i32) {
    %c0_i32 = arith.constant 0 : i32
    %c0_i32_0 = arith.constant 0 : i32
    %c0_i32_1 = arith.constant 0 : i32
    return %arg0, %c0_i32, %c0_i32_0 : i32, i32, i32
  }
  func.func @transform_2(%arg0: i32, %arg1: i32) -> i32 {
    %c0_i32 = arith.constant 0 : i32
    %c0_i32_0 = arith.constant 0 : i32
    return %c0_i32 : i32
  }
  func.func @transform_3(%arg0: i32, %arg1: i32) -> (i32, i32, i32) {
    %c0_i32 = arith.constant 0 : i32
    %c0_i32_0 = arith.constant 0 : i32
    return %arg0, %arg1, %c0_i32 : i32, i32, i32
  }
}

</mosaic_0001>

<llo_original>
// kernel: coam_forward.1
$region0: #{coam_forward.1}
  #allocation0 [shape = 'u32[]', space=smem, size = 0x4, offset = 0x4, fixed_abs, tag = 'smem constant byte address 0x4 - core index']
  #allocation1 [shape = 'u32[144,128]{1,0:T(1,128)}', space=vmem, size = 0x12000, scoped, tag = 'internal scratch']
  #allocation2 [shape = 'f32[1]{0:T(128)S(6)}', space=smem, size = 0x200, scoped, tag = 'scoped memory for coam_forward.1']
  %s0 = inlined_call_operand.vmem [shape: f32[2,128,256], index: 0, kind: input, shape index: {}]
  %s1 = inlined_call_operand.vmem [shape: f32[2,128,256], index: 1, kind: input, shape index: {}]
  %s2 = inlined_call_operand.<no memory space> [shape: f32[1], index: 2, kind: input, shape index: {}]
  %s3 = inlined_call_operand.vmem [shape: f32[2,128,256], index: 3, kind: output, shape index: {}]
  %s4 = sld [smem:[#allocation0]]
  $region45: #{coam_forward.1} parent=0
    _
  %s6 = ssub.s32 1, %s4
  %s7 = scalar_select 0, %s6, %s4
  %8 = sst [smem:[#allocation2]] %s2
  loop: start=0, step=1, limit=4
  $region2: #{coam_forward.1} parent=0 // loop_pre_header
    _
  $region3: #{coam_forward.1} parent=0 // loop_header
    %s10 = sphi 0, %s14
    %p11 = scmp.ge.s32.totalorder %s10, 4
    %s17 = sphi 0, %s29
    %s18 = sphi 0, %s25
    %s19 = sphi 0, %s17
    %s20 = sphi 0, %s18
    %s21 = sphi 0, %s19
    %s22 = sphi 0, %s20
    %s32 = sphi 0, %s34
    %s35 = sphi 0, %s32
    %s36 = sphi 0, %s35
    %s52 = sphi 0, %s36
    %s58 = sphi 0, %s60
    %s61 = sphi 0, %s58
    %s62 = sphi 0, %s61
    %s78 = sphi 0, %s62
    %s82 = sphi 0, %s82
    %s84 = sphi 0, %s82
    %s85 = sphi 0, %s84
    %s99 = sphi 0, %s85
    %s107 = sphi 0, %s109
    %s110 = sphi 0, %s107
    %s111 = sphi 0, %s110
    %s127 = sphi 0, %s111
  $region4: #{coam_forward.1} parent=0 // loop_header_branch
    %13 = sbr.rel (%p11) target = $region8
  $region5: #{coam_forward.1} parent=0 // loop_body
    %s15 = ssub.s32 %s10, 1
    %s16 = ssub.s32 %s10, 2
    %s23 = sadd.s32 1, %s18
    %p24 = scmp.ge.s32.totalorder %s23, 1
    %s25 = scalar_select %p24, 0, %s23
    %s26 = sadd.s32 1, %s17
    %s27 = scalar_select %p24, %s26, %s17
    %p28 = scmp.ge.s32.totalorder %s27, 2
    %s29 = scalar_select %p28, 0, %s27
    %s30 = ssub.s32 %s17, %s29
    %p31 = scmp.eq.s32.totalorder %s30, 0
    %s33 = sadd.s32 %s32, 1
    %s34 = scalar_select %p31, %s32, %s33
    %p37 = pneg %p31
    %p38 = scmp.eq.s32.totalorder %s10, 1
    %p39 = por %p37, %p38
    %p40 = scmp.ne.s32.totalorder %s32, %s35
    %p41 = scmp.eq.s32.totalorder %s10, 0
    %p42 = por %p40, %p41
    %p43 = scmp.ne.s32.totalorder %s32, %s35
    %p44 = scmp.eq.s32.totalorder %s15, 1
    %p45 = por %p43, %p44
    %p46 = scmp.ne.s32.totalorder %s35, %s36
    %p47 = scmp.eq.s32.totalorder %s15, 0
    %p48 = por %p46, %p47
    %p49 = scmp.ne.s32.totalorder %s35, %s36
    %p50 = scmp.eq.s32.totalorder %s16, 1
    %p51 = por %p49, %p50
    %p53 = scmp.ne.s32.totalorder %s36, %s52
    %p54 = scmp.eq.s32.totalorder %s16, 0
    %p55 = por %p53, %p54
    %s56 = ssub.s32 %s17, %s29
    %p57 = scmp.eq.s32.totalorder %s56, 0
    %s59 = sadd.s32 %s58, 1
    %s60 = scalar_select %p57, %s58, %s59
    %p63 = pneg %p57
    %p64 = scmp.eq.s32.totalorder %s10, 1
    %p65 = por %p63, %p64
    %p66 = scmp.ne.s32.totalorder %s58, %s61
    %p67 = scmp.eq.s32.totalorder %s10, 0
    %p68 = por %p66, %p67
    %p69 = scmp.ne.s32.totalorder %s58, %s61
    %p70 = scmp.eq.s32.totalorder %s15, 1
    %p71 = por %p69, %p70
    %p72 = scmp.ne.s32.totalorder %s61, %s62
    %p73 = scmp.eq.s32.totalorder %s15, 0
    %p74 = por %p72, %p73
    %p75 = scmp.ne.s32.totalorder %s61, %s62
    %p76 = scmp.eq.s32.totalorder %s16, 1
    %p77 = por %p75, %p76
    %p79 = scmp.ne.s32.totalorder %s62, %s78
    %p80 = scmp.eq.s32.totalorder %s16, 0
    %p81 = por %p79, %p80
    %s83 = sadd.s32 %s82, 1
    %p86 = scmp.eq.s32.totalorder %s10, 1
    %p87 = scmp.ne.s32.totalorder %s82, %s84
    %p88 = scmp.eq.s32.totalorder %s10, 0
    %p89 = por %p87, %p88
    %p90 = scmp.ne.s32.totalorder %s82, %s84
    %p91 = scmp.eq.s32.totalorder %s15, 1
    %p92 = por %p90, %p91
    %p93 = scmp.ne.s32.totalorder %s84, %s85
    %p94 = scmp.eq.s32.totalorder %s15, 0
    %p95 = por %p93, %p94
    %p96 = scmp.ne.s32.totalorder %s84, %s85
    %p97 = scmp.eq.s32.totalorder %s16, 1
    %p98 = por %p96, %p97
    %p100 = scmp.ne.s32.totalorder %s85, %s99
    %p101 = scmp.eq.s32.totalorder %s16, 0
    %p102 = por %p100, %p101
    %s103 = ssub.s32 %s17, %s29
    %s104 = ssub.s32 %s18, %s25
    %s105 = sor.u32 %s103, %s104
    %p106 = scmp.eq.s32.totalorder %s105, 0
    %s108 = sadd.s32 %s107, 1
    %s109 = scalar_select %p106, %s107, %s108
    %p112 = pneg %p106
    %p113 = scmp.eq.s32.totalorder %s10, 1
    %p114 = por %p112, %p113
    %p115 = scmp.ne.s32.totalorder %s107, %s110
    %p116 = scmp.eq.s32.totalorder %s10, 0
    %p117 = por %p115, %p116
    %p118 = scmp.ne.s32.totalorder %s107, %s110
    %p119 = scmp.eq.s32.totalorder %s15, 1
    %p120 = por %p118, %p119
    %p121 = scmp.ne.s32.totalorder %s110, %s111
    %p122 = scmp.eq.s32.totalorder %s15, 0
    %p123 = por %p121, %p122
    %p124 = scmp.ne.s32.totalorder %s110, %s111
    %p125 = scmp.eq.s32.totalorder %s16, 1
    %p126 = por %p124, %p125
    %p128 = scmp.ne.s32.totalorder %s111, %s127
    %p129 = scmp.eq.s32.totalorder %s16, 0
    %p130 = por %p128, %p129
    %p131 = scmp.le.s32.totalorder 1, %s10
    %p132 = scmp.lt.s32.totalorder %s10, 3
    %p133 = pnand %p131, %p132
    %p134 = pneg %p133
    // Predicated region
    $region9: #{coam_forward.1} parent=5 // pred_check
      _
    $region10: #{coam_forward.1} parent=5 // pred_check_branch
      %136 = sbr.rel (%p133) target = $region12
    $region11: #{coam_forward.1} parent=5 // pred_region
      %s137 = ssub.s32 %s10, 1
      // Predicated region
      $region13: #{coam_forward.1} parent=11 // pred_check
        %p138 = pneg %p95
      $region14: #{coam_forward.1} parent=11 // pred_check_branch
        %140 = sbr.rel (%p138) target = $region16
      $region15: #{coam_forward.1} parent=11 // pred_region
        _
      $region16: #{coam_forward.1} parent=11 // pred_fallthru
        _
    $region12: #{coam_forward.1} parent=5 // pred_fallthru
      _
    %p141 = scmp.lt.s32.totalorder %s10, 2
    // Predicated region
    $region17: #{coam_forward.1} parent=5 // pred_check
      %p142 = pneg %p141
    $region18: #{coam_forward.1} parent=5 // pred_check_branch
      %144 = sbr.rel (%p142) target = $region20
    $region19: #{coam_forward.1} parent=5 // pred_region
      // Predicated region
      $region21: #{coam_forward.1} parent=19 // pred_check
        %p145 = pneg %p42
      $region22: #{coam_forward.1} parent=19 // pred_check_branch
        %147 = sbr.rel (%p145) target = $region24
      $region23: #{coam_forward.1} parent=19 // pred_region
        %p148 = scmp.lt.s32.totalorder %s17, 1
        %s149 = scalar_select %p148, %s17, 1
        %s150 = smul.addr %s149, 32
        %s151 = smul.addr %s150, 8
        %s152 = scalar_lea.vmem %s0, %s151
      $region24: #{coam_forward.1} parent=19 // pred_fallthru
        _
      // Predicated region
      $region25: #{coam_forward.1} parent=19 // pred_check
        %p153 = pneg %p68
      $region26: #{coam_forward.1} parent=19 // pred_check_branch
        %155 = sbr.rel (%p153) target = $region28
      $region27: #{coam_forward.1} parent=19 // pred_region
        %p156 = scmp.lt.s32.totalorder %s17, 1
        %s157 = scalar_select %p156, %s17, 1
        %s158 = smul.addr %s157, 32
        %s159 = smul.addr %s158, 8
        %s160 = scalar_lea.vmem %s1, %s159
      $region28: #{coam_forward.1} parent=19 // pred_fallthru
        _
    $region20: #{coam_forward.1} parent=5 // pred_fallthru
      _
    %p161 = scmp.le.s32.totalorder 1, %s10
    %p162 = scmp.lt.s32.totalorder %s10, 3
    %p163 = pnand %p161, %p162
    %p164 = pneg %p163
    // Predicated region
    $region29: #{coam_forward.1} parent=5 // pred_check
      _
    $region30: #{coam_forward.1} parent=5 // pred_check_branch
      %166 = sbr.rel (%p163) target = $region32
    $region31: #{coam_forward.1} parent=5 // pred_region
      %s167 = ssub.s32 %s10, 1
      %p168 = scmp.lt.s32.totalorder %s19, 1
      %s169 = scalar_select %p168, %s19, 1
      %s170 = smul.addr %s169, 32
      %s171 = smul.addr %s170, 8
      %s172 = scalar_lea.vmem %s0, %s171
      %p173 = pneg %p48
      %p174 = pneg %p45
      %p175 = scmp.lt.s32.totalorder %s19, 1
      %s176 = scalar_select %p175, %s19, 1
      %s177 = smul.addr %s176, 32
      %s178 = smul.addr %s177, 8
      %s179 = scalar_lea.vmem %s1, %s178
      %p180 = pneg %p74
      %p181 = pneg %p71
      %p182 = pneg %p95
      %p183 = pneg %p92
      %p184 = pneg %p123
      %p185 = pneg %p120
      %s186 = smul.u32 16, %s20
      %p187 = scmp.lt.s32.totalorder %s19, 1
      %s188 = scalar_select %p187, %s19, 1
      %p189 = scmp.lt.s32.totalorder %s186, 15
      %s190 = scalar_select %p189, %s186, 15
      %s191 = smul.addr %s190, 2
      %s192 = smul.addr %s188, 32
      %s193 = sadd.s32 %s191, %s192
      %s194 = smul.addr %s193, 8
      %s195 = scalar_lea.vmem %s3, %s194
      %p196 = scmp.lt.s32.totalorder %s19, 1
      %s197 = scalar_select %p196, %s19, 1
      %s198 = smul.addr %s197, 32
      %s199 = smul.addr %s198, 8
      %s200 = scalar_lea.vmem %s0, %s199
      %p201 = scmp.lt.s32.totalorder %s19, 1
      %s202 = scalar_select %p201, %s19, 1
      %s203 = smul.addr %s202, 32
      %s204 = smul.addr %s203, 8
      %s205 = scalar_lea.vmem %s1, %s204
      %s206 = smul.u32 16, %s20
      %p207 = scmp.lt.s32.totalorder %s19, 1
      %s208 = scalar_select %p207, %s19, 1
      %p209 = scmp.lt.s32.totalorder %s206, 15
      %s210 = scalar_select %p209, %s206, 15
      %s211 = smul.addr %s210, 2
      %s212 = smul.addr %s208, 32
      %s213 = sadd.s32 %s211, %s212
      %s214 = smul.addr %s213, 8
      %s215 = scalar_lea.vmem %s3, %s214
      %s216 = smul.u32 16, %s20
      %v217 = vld [vmem:[%s205] sm:$0xff]
      %v218 = vld [vmem:[%s205 + $0x8] sm:$0xff]
      %v219 = vld [vmem:[%s205 + $0x10] sm:$0xff]
      %v220 = vld [vmem:[%s205 + $0x18] sm:$0xff]
      %v221 = vld [vmem:[%s205 + $0x20] sm:$0xff]
      %v222 = vld [vmem:[%s205 + $0x28] sm:$0xff]
      %v223 = vld [vmem:[%s205 + $0x30] sm:$0xff]
      %v224 = vld [vmem:[%s205 + $0x38] sm:$0xff]
      %v225 = vld [vmem:[%s205 + $0x40] sm:$0xff]
      %v226 = vld [vmem:[%s205 + $0x48] sm:$0xff]
      %v227 = vld [vmem:[%s205 + $0x50] sm:$0xff]
      %v228 = vld [vmem:[%s205 + $0x58] sm:$0xff]
      %v229 = vld [vmem:[%s205 + $0x60] sm:$0xff]
      %v230 = vld [vmem:[%s205 + $0x68] sm:$0xff]
      %v231 = vld [vmem:[%s205 + $0x70] sm:$0xff]
      %v232 = vld [vmem:[%s205 + $0x78] sm:$0xff]
      %v233 = vld [vmem:[%s205 + $0x80] sm:$0xff]
      %v234 = vld [vmem:[%s205 + $0x88] sm:$0xff]
      %v235 = vld [vmem:[%s205 + $0x90] sm:$0xff]
      %v236 = vld [vmem:[%s205 + $0x98] sm:$0xff]
      %v237 = vld [vmem:[%s205 + $0xa0] sm:$0xff]
      %v238 = vld [vmem:[%s205 + $0xa8] sm:$0xff]
      %v239 = vld [vmem:[%s205 + $0xb0] sm:$0xff]
      %v240 = vld [vmem:[%s205 + $0xb8] sm:$0xff]
      %v241 = vld [vmem:[%s205 + $0xc0] sm:$0xff]
      %v242 = vld [vmem:[%s205 + $0xc8] sm:$0xff]
      %v243 = vld [vmem:[%s205 + $0xd0] sm:$0xff]
      %v244 = vld [vmem:[%s205 + $0xd8] sm:$0xff]
      %v245 = vld [vmem:[%s205 + $0xe0] sm:$0xff]
      %v246 = vld [vmem:[%s205 + $0xe8] sm:$0xff]
      %v247 = vld [vmem:[%s205 + $0xf0] sm:$0xff]
      %v248 = vld [vmem:[%s205 + $0xf8] sm:$0xff]
      %v249 = vld [vmem:[%s200] sm:$0xff]
      %v250 = vld [vmem:[%s200 + $0x8] sm:$0xff]
      %v251 = vld [vmem:[%s200 + $0x10] sm:$0xff]
      %v252 = vld [vmem:[%s200 + $0x18] sm:$0xff]
      %v253 = vld [vmem:[%s200 + $0x20] sm:$0xff]
      %v254 = vld [vmem:[%s200 + $0x28] sm:$0xff]
      %v255 = vld [vmem:[%s200 + $0x30] sm:$0xff]
      %v256 = vld [vmem:[%s200 + $0x38] sm:$0xff]
      %v257 = vld [vmem:[%s200 + $0x40] sm:$0xff]
      %v258 = vld [vmem:[%s200 + $0x48] sm:$0xff]
      %v259 = vld [vmem:[%s200 + $0x50] sm:$0xff]
      %v260 = vld [vmem:[%s200 + $0x58] sm:$0xff]
      %v261 = vld [vmem:[%s200 + $0x60] sm:$0xff]
      %v262 = vld [vmem:[%s200 + $0x68] sm:$0xff]
      %v263 = vld [vmem:[%s200 + $0x70] sm:$0xff]
      %v264 = vld [vmem:[%s200 + $0x78] sm:$0xff]
      %v265 = vld [vmem:[%s200 + $0x80] sm:$0xff]
      %v266 = vld [vmem:[%s200 + $0x88] sm:$0xff]
      %v267 = vld [vmem:[%s200 + $0x90] sm:$0xff]
      %v268 = vld [vmem:[%s200 + $0x98] sm:$0xff]
      %v269 = vld [vmem:[%s200 + $0xa0] sm:$0xff]
      %v270 = vld [vmem:[%s200 + $0xa8] sm:$0xff]
      %v271 = vld [vmem:[%s200 + $0xb0] sm:$0xff]
      %v272 = vld [vmem:[%s200 + $0xb8] sm:$0xff]
      %v273 = vld [vmem:[%s200 + $0xc0] sm:$0xff]
      %v274 = vld [vmem:[%s200 + $0xc8] sm:$0xff]
      %v275 = vld [vmem:[%s200 + $0xd0] sm:$0xff]
      %v276 = vld [vmem:[%s200 + $0xd8] sm:$0xff]
      %v277 = vld [vmem:[%s200 + $0xe0] sm:$0xff]
      %v278 = vld [vmem:[%s200 + $0xe8] sm:$0xff]
      %v279 = vld [vmem:[%s200 + $0xf0] sm:$0xff]
      %v280 = vld [vmem:[%s200 + $0xf8] sm:$0xff]
      %281 = vmatprep.subr.mxu0 %v218
      %282 = vmatpush1.xpose.msra.mxu0 %v217
      %283 = vmatprep.subr.mxu0 %v220
      %284 = vmatpush1.xpose.msra.mxu0 %v219
      %285 = vmatprep.subr.mxu0 %v222
      %286 = vmatpush1.xpose.msra.mxu0 %v221
      %287 = vmatprep.subr.mxu0 %v224
      %288 = vmatpush1.xpose.msra.mxu0 %v223
      %289 = vmatprep.subr.mxu0 %v226
      %290 = vmatpush1.xpose.msra.mxu0 %v225
      %291 = vmatprep.subr.mxu0 %v228
      %292 = vmatpush1.xpose.msra.mxu0 %v227
      %293 = vmatprep.subr.mxu0 %v230
      %294 = vmatpush1.xpose.msra.mxu0 %v229
      %295 = vmatprep.subr.mxu0 %v232
      %296 = vmatpush1.xpose.msra.mxu0 %v231
      %297 = vmatprep.subr.mxu0 %v234
      %298 = vmatpush1.xpose.msra.mxu0 %v233
      %299 = vmatprep.subr.mxu0 %v236
      %300 = vmatpush1.xpose.msra.mxu0 %v235
      %301 = vmatprep.subr.mxu0 %v238
      %302 = vmatpush1.xpose.msra.mxu0 %v237
      %303 = vmatprep.subr.mxu0 %v240
      %304 = vmatpush1.xpose.msra.mxu0 %v239
      %305 = vmatprep.subr.mxu0 %v242
      %306 = vmatpush1.xpose.msra.mxu0 %v241
      %307 = vmatprep.subr.mxu0 %v244
      %308 = vmatpush1.xpose.msra.mxu0 %v243
      %309 = vmatprep.subr.mxu0 %v246
      %310 = vmatpush1.xpose.msra.mxu0 %v245
      %311 = vmatprep.subr.mxu0 %v248
      %312 = vmatpush1.xpose.msra.mxu0 %v247
      %313 = vmatprep.subr.mxu0 0.0
      %314 = vmatpush1.xpose.msra.mxu0 0.0
      %315 = vmatprep.subr.mxu0 0.0
      %316 = vmatpush1.xpose.msra.mxu0 0.0
      %317 = vmatprep.subr.mxu0 0.0
      %318 = vmatpush1.xpose.msra.mxu0 0.0
      %319 = vmatprep.subr.mxu0 0.0
      %320 = vmatpush1.xpose.msra.mxu0 0.0
      %321 = vmatprep.subr.mxu0 0.0
      %322 = vmatpush1.xpose.msra.mxu0 0.0
      %323 = vmatprep.subr.mxu0 0.0
      %324 = vmatpush1.xpose.msra.mxu0 0.0
      %325 = vmatprep.subr.mxu0 0.0
      %326 = vmatpush1.xpose.msra.mxu0 0.0
      %327 = vmatprep.subr.mxu0 0.0
      %328 = vmatpush1.xpose.msra.mxu0 0.0
      %329 = vmatprep.subr.mxu0 0.0
      %330 = vmatpush1.xpose.msra.mxu0 0.0
      %331 = vmatprep.subr.mxu0 0.0
      %332 = vmatpush1.xpose.msra.mxu0 0.0
      %333 = vmatprep.subr.mxu0 0.0
      %334 = vmatpush1.xpose.msra.mxu0 0.0
      %335 = vmatprep.subr.mxu0 0.0
      %336 = vmatpush1.xpose.msra.mxu0 0.0
      %337 = vmatprep.subr.mxu0 0.0
      %338 = vmatpush1.xpose.msra.mxu0 0.0
      %339 = vmatprep.subr.mxu0 0.0
      %340 = vmatpush1.xpose.msra.mxu0 0.0
      %341 = vmatprep.subr.mxu0 0.0
      %342 = vmatpush1.xpose.msra.mxu0 0.0
      %343 = vmatprep.subr.mxu0 0.0
      %344 = vmatpush1.xpose.msra.mxu0 0.0
      %345 = vmatprep.mubr.f32.mxu0 %v218
      %346 = vmatmul.mubr.f32.gmra.mrb[0].mxu0 %v217
      %v347 = vpop.f32.mrb[0].mxu0
      %v348 = vadd.f32 0.0, %v347
      %v349 = vpop.f32.mrb[0].mxu0
      %350 = vmatprep.mubr.f32.mxu0 %v220
      %351 = vmatmul.mubr.f32.gmra.mrb[0].mxu0 %v219
      %v352 = vpop.f32.mrb[0].mxu0
      %v353 = vadd.f32 0.0, %v352
      %v354 = vpop.f32.mrb[0].mxu0
      %355 = vmatprep.mubr.f32.mxu0 %v222
      %356 = vmatmul.mubr.f32.gmra.mrb[0].mxu0 %v221
      %v357 = vpop.f32.mrb[0].mxu0
      %v358 = vadd.f32 0.0, %v357
      %v359 = vpop.f32.mrb[0].mxu0
      %360 = vmatprep.mubr.f32.mxu0 %v224
      %361 = vmatmul.mubr.f32.gmra.mrb[0].mxu0 %v223
      %v362 = vpop.f32.mrb[0].mxu0
      %v363 = vadd.f32 0.0, %v362
      %v364 = vpop.f32.mrb[0].mxu0
      %365 = vmatprep.mubr.f32.mxu0 %v226
      %366 = vmatmul.mubr.f32.gmra.mrb[0].mxu0 %v225
      %v367 = vpop.f32.mrb[0].mxu0
      %v368 = vadd.f32 0.0, %v367
      %v369 = vpop.f32.mrb[0].mxu0
      %370 = vmatprep.mubr.f32.mxu0 %v228
      %371 = vmatmul.mubr.f32.gmra.mrb[0].mxu0 %v227
      %v372 = vpop.f32.mrb[0].mxu0
      %v373 = vadd.f32 0.0, %v372
      %v374 = vpop.f32.mrb[0].mxu0
      %375 = vmatprep.mubr.f32.mxu0 %v230
      %376 = vmatmul.mubr.f32.gmra.mrb[0].mxu0 %v229
      %v377 = vpop.f32.mrb[0].mxu0
      %v378 = vadd.f32 0.0, %v377
      %v379 = vpop.f32.mrb[0].mxu0
      %380 = vmatprep.mubr.f32.mxu0 %v232
      %381 = vmatmul.mubr.f32.gmra.mrb[0].mxu0 %v231
      %v382 = vpop.f32.mrb[0].mxu0
      %v383 = vadd.f32 0.0, %v382
      %v384 = vpop.f32.mrb[0].mxu0
      %385 = vmatprep.mubr.f32.mxu0 %v234
      %386 = vmatmul.mubr.f32.gmra.mrb[0].mxu0 %v233
      %v387 = vpop.f32.mrb[0].mxu0
      %v388 = vadd.f32 0.0, %v387
      %v389 = vpop.f32.mrb[0].mxu0
      %390 = vmatprep.mubr.f32.mxu0 %v236
      %391 = vmatmul.mubr.f32.gmra.mrb[0].mxu0 %v235
      %v392 = vpop.f32.mrb[0].mxu0
      %v393 = vadd.f32 0.0, %v392
      %v394 = vpop.f32.mrb[0].mxu0
      %395 = vmatprep.mubr.f32.mxu0 %v238
      %396 = vmatmul.mubr.f32.gmra.mrb[0].mxu0 %v237
      %v397 = vpop.f32.mrb[0].mxu0
      %v398 = vadd.f32 0.0, %v397
      %v399 = vpop.f32.mrb[0].mxu0
      %400 = vmatprep.mubr.f32.mxu0 %v240
      %401 = vmatmul.mubr.f32.gmra.mrb[0].mxu0 %v239
      %v402 = vpop.f32.mrb[0].mxu0
      %v403 = vadd.f32 0.0, %v402
      %v404 = vpop.f32.mrb[0].mxu0
      %405 = vmatprep.mubr.f32.mxu0 %v242
      %406 = vmatmul.mubr.f32.gmra.mrb[0].mxu0 %v241
      %v407 = vpop.f32.mrb[0].mxu0
      %v408 = vadd.f32 0.0, %v407
      %v409 = vpop.f32.mrb[0].mxu0
      %410 = vmatprep.mubr.f32.mxu0 %v244
      %411 = vmatmul.mubr.f32.gmra.mrb[0].mxu0 %v243
      %v412 = vpop.f32.mrb[0].mxu0
      %v413 = vadd.f32 0.0, %v412
      %v414 = vpop.f32.mrb[0].mxu0
      %415 = vmatprep.mubr.f32.mxu0 %v246
      %416 = vmatmul.mubr.f32.gmra.mrb[0].mxu0 %v245
      %v417 = vpop.f32.mrb[0].mxu0
      %v418 = vadd.f32 0.0, %v417
      %v419 = vpop.f32.mrb[0].mxu0
      %420 = vmatprep.mubr.f32.mxu0 %v248
      %421 = vmatmul.mubr.f32.gmra.mrb[0].mxu0 %v247
      %v422 = vpop.f32.mrb[0].mxu0
      %v423 = vadd.f32 0.0, %v422
      %v424 = vpop.f32.mrb[0].mxu0
      %425 = vdwg.mxu0
      %426 = vmin.xlane.f32.xlu0 %v348
      %v427 = vpop.xlane.xlu0 %426
      %428 = vmin.xlane.f32.xlu0 %v353
      %v429 = vpop.xlane.xlu0 %428
      %430 = vmin.xlane.f32.xlu0 %v358
      %v431 = vpop.xlane.xlu0 %430
      %432 = vmin.xlane.f32.xlu0 %v363
      %v433 = vpop.xlane.xlu0 %432
      %434 = vmin.xlane.f32.xlu0 %v368
      %v435 = vpop.xlane.xlu0 %434
      %436 = vmin.xlane.f32.xlu0 %v373
      %v437 = vpop.xlane.xlu0 %436
      %438 = vmin.xlane.f32.xlu0 %v378
      %v439 = vpop.xlane.xlu0 %438
      %440 = vmin.xlane.f32.xlu0 %v383
      %v441 = vpop.xlane.xlu0 %440
      %442 = vmin.xlane.f32.xlu0 %v388
      %v443 = vpop.xlane.xlu0 %442
      %444 = vmin.xlane.f32.xlu0 %v393
      %v445 = vpop.xlane.xlu0 %444
      %446 = vmin.xlane.f32.xlu0 %v398
      %v447 = vpop.xlane.xlu0 %446
      %448 = vmin.xlane.f32.xlu0 %v403
      %v449 = vpop.xlane.xlu0 %448
      %450 = vmin.xlane.f32.xlu0 %v408
      %v451 = vpop.xlane.xlu0 %450
      %452 = vmin.xlane.f32.xlu0 %v413
      %v453 = vpop.xlane.xlu0 %452
      %454 = vmin.xlane.f32.xlu0 %v418
      %v455 = vpop.xlane.xlu0 %454
      %456 = vmin.xlane.f32.xlu0 %v423
      %v457 = vpop.xlane.xlu0 %456
      %v458 = vsub.f32 %v427, %v348
      %v459 = vsub.f32 %v429, %v353
      %v460 = vsub.f32 %v431, %v358
      %v461 = vsub.f32 %v433, %v363
      %v462 = vsub.f32 %v435, %v368
      %v463 = vsub.f32 %v437, %v373
      %v464 = vsub.f32 %v439, %v378
      %v465 = vsub.f32 %v441, %v383
      %v466 = vsub.f32 %v443, %v388
      %v467 = vsub.f32 %v445, %v393
      %v468 = vsub.f32 %v447, %v398
      %v469 = vsub.f32 %v449, %v403
      %v470 = vsub.f32 %v451, %v408
      %v471 = vsub.f32 %v453, %v413
      %v472 = vsub.f32 %v455, %v418
      %v473 = vsub.f32 %v457, %v423
      %v474 = vmul.f32 %v458, 1.442695
      %v475 = vpow.pop %v474
      %v476 = vmul.f32 %v459, 1.442695
      %v477 = vpow.pop %v476
      %v478 = vmul.f32 %v460, 1.442695
      %v479 = vpow.pop %v478
      %v480 = vmul.f32 %v461, 1.442695
      %v481 = vpow.pop %v480
      %v482 = vmul.f32 %v462, 1.442695
      %v483 = vpow.pop %v482
      %v484 = vmul.f32 %v463, 1.442695
      %v485 = vpow.pop %v484
      %v486 = vmul.f32 %v464, 1.442695
      %v487 = vpow.pop %v486
      %v488 = vmul.f32 %v465, 1.442695
      %v489 = vpow.pop %v488
      %v490 = vmul.f32 %v466, 1.442695
      %v491 = vpow.pop %v490
      %v492 = vmul.f32 %v467, 1.442695
      %v493 = vpow.pop %v492
      %v494 = vmul.f32 %v468, 1.442695
      %v495 = vpow.pop %v494
      %v496 = vmul.f32 %v469, 1.442695
      %v497 = vpow.pop %v496
      %v498 = vmul.f32 %v470, 1.442695
      %v499 = vpow.pop %v498
      %v500 = vmul.f32 %v471, 1.442695
      %v501 = vpow.pop %v500
      %v502 = vmul.f32 %v472, 1.442695
      %v503 = vpow.pop %v502
      %v504 = vmul.f32 %v473, 1.442695
      %v505 = vpow.pop %v504
      %506 = vadd.xlane.f32.xlu0 %v475
      %v507 = vpop.xlane.xlu0 %506
      %508 = vadd.xlane.f32.xlu0 %v477
      %v509 = vpop.xlane.xlu0 %508
      %510 = vadd.xlane.f32.xlu0 %v479
      %v511 = vpop.xlane.xlu0 %510
      %512 = vadd.xlane.f32.xlu0 %v481
      %v513 = vpop.xlane.xlu0 %512
      %514 = vadd.xlane.f32.xlu0 %v483
      %v515 = vpop.xlane.xlu0 %514
      %516 = vadd.xlane.f32.xlu0 %v485
      %v517 = vpop.xlane.xlu0 %516
      %518 = vadd.xlane.f32.xlu0 %v487
      %v519 = vpop.xlane.xlu0 %518
      %520 = vadd.xlane.f32.xlu0 %v489
      %v521 = vpop.xlane.xlu0 %520
      %522 = vadd.xlane.f32.xlu0 %v491
      %v523 = vpop.xlane.xlu0 %522
      %524 = vadd.xlane.f32.xlu0 %v493
      %v525 = vpop.xlane.xlu0 %524
      %526 = vadd.xlane.f32.xlu0 %v495
      %v527 = vpop.xlane.xlu0 %526
      %528 = vadd.xlane.f32.xlu0 %v497
      %v529 = vpop.xlane.xlu0 %528
      %530 = vadd.xlane.f32.xlu0 %v499
      %v531 = vpop.xlane.xlu0 %530
      %532 = vadd.xlane.f32.xlu0 %v501
      %v533 = vpop.xlane.xlu0 %532
      %534 = vadd.xlane.f32.xlu0 %v503
      %v535 = vpop.xlane.xlu0 %534
      %536 = vadd.xlane.f32.xlu0 %v505
      %v537 = vpop.xlane.xlu0 %536
      %v538 = vrcp.pop %v507
      %v539 = vrcp.pop %v509
      %v540 = vrcp.pop %v511
      %v541 = vrcp.pop %v513
      %v542 = vrcp.pop %v515
      %v543 = vrcp.pop %v517
      %v544 = vrcp.pop %v519
      %v545 = vrcp.pop %v521
      %v546 = vrcp.pop %v523
      %v547 = vrcp.pop %v525
      %v548 = vrcp.pop %v527
      %v549 = vrcp.pop %v529
      %v550 = vrcp.pop %v531
      %v551 = vrcp.pop %v533
      %v552 = vrcp.pop %v535
      %v553 = vrcp.pop %v537
      %v554 = vmul.f32 %v475, %v538
      %v555 = vmul.f32 %v477, %v539
      %v556 = vmul.f32 %v479, %v540
      %v557 = vmul.f32 %v481, %v541
      %v558 = vmul.f32 %v483, %v542
      %v559 = vmul.f32 %v485, %v543
      %v560 = vmul.f32 %v487, %v544
      %v561 = vmul.f32 %v489, %v545
      %v562 = vmul.f32 %v491, %v546
      %v563 = vmul.f32 %v493, %v547
      %v564 = vmul.f32 %v495, %v548
      %v565 = vmul.f32 %v497, %v549
      %v566 = vmul.f32 %v499, %v550
      %v567 = vmul.f32 %v501, %v551
      %v568 = vmul.f32 %v503, %v552
      %v569 = vmul.f32 %v505, %v553
      %s570 = sld [smem:[#allocation2]]
      %v571 = vstv %s570
      %v572 = vmul.f32 %v554, %v571
      %v573 = vmul.f32 %v555, %v571
      %v574 = vmul.f32 %v556, %v571
      %v575 = vmul.f32 %v557, %v571
      %v576 = vmul.f32 %v558, %v571
      %v577 = vmul.f32 %v559, %v571
      %v578 = vmul.f32 %v560, %v571
      %v579 = vmul.f32 %v561, %v571
      %v580 = vmul.f32 %v562, %v571
      %v581 = vmul.f32 %v563, %v571
      %v582 = vmul.f32 %v564, %v571
      %v583 = vmul.f32 %v565, %v571
      %v584 = vmul.f32 %v566, %v571
      %v585 = vmul.f32 %v567, %v571
      %v586 = vmul.f32 %v568, %v571
      %v587 = vmul.f32 %v569, %v571
      %588 = vmatprep.subr.mxu0 %v250
      %589 = vmatpush1.msra.mxu0 %v249
      %590 = vmatprep.subr.mxu0 %v252
      %591 = vmatpush1.msra.mxu0 %v251
      %592 = vmatprep.subr.mxu0 %v254
      %593 = vmatpush1.msra.mxu0 %v253
      %594 = vmatprep.subr.mxu0 %v256
      %595 = vmatpush1.msra.mxu0 %v255
      %596 = vmatprep.subr.mxu0 %v258
      %597 = vmatpush1.msra.mxu0 %v257
      %598 = vmatprep.subr.mxu0 %v260
      %599 = vmatpush1.msra.mxu0 %v259
      %600 = vmatprep.subr.mxu0 %v262
      %601 = vmatpush1.msra.mxu0 %v261
      %602 = vmatprep.subr.mxu0 %v264
      %603 = vmatpush1.msra.mxu0 %v263
      %604 = vmatprep.subr.mxu0 %v266
      %605 = vmatpush1.msra.mxu0 %v265
      %606 = vmatprep.subr.mxu0 %v268
      %607 = vmatpush1.msra.mxu0 %v267
      %608 = vmatprep.subr.mxu0 %v270
      %609 = vmatpush1.msra.mxu0 %v269
      %610 = vmatprep.subr.mxu0 %v272
      %611 = vmatpush1.msra.mxu0 %v271
      %612 = vmatprep.subr.mxu0 %v274
      %613 = vmatpush1.msra.mxu0 %v273
      %614 = vmatprep.subr.mxu0 %v276
      %615 = vmatpush1.msra.mxu0 %v275
      %616 = vmatprep.subr.mxu0 %v278
      %617 = vmatpush1.msra.mxu0 %v277
      %618 = vmatprep.subr.mxu0 %v280
      %619 = vmatpush1.msra.mxu0 %v279
      %620 = vmatprep.subr.mxu0 0.0
      %621 = vmatpush1.msra.mxu0 0.0
      %622 = vmatprep.subr.mxu0 0.0
      %623 = vmatpush1.msra.mxu0 0.0
      %624 = vmatprep.subr.mxu0 0.0
      %625 = vmatpush1.msra.mxu0 0.0
      %626 = vmatprep.subr.mxu0 0.0
      %627 = vmatpush1.msra.mxu0 0.0
      %628 = vmatprep.subr.mxu0 0.0
      %629 = vmatpush1.msra.mxu0 0.0
      %630 = vmatprep.subr.mxu0 0.0
      %631 = vmatpush1.msra.mxu0 0.0
      %632 = vmatprep.subr.mxu0 0.0
      %633 = vmatpush1.msra.mxu0 0.0
      %634 = vmatprep.subr.mxu0 0.0
      %635 = vmatpush1.msra.mxu0 0.0
      %636 = vmatprep.subr.mxu0 0.0
      %637 = vmatpush1.msra.mxu0 0.0
      %638 = vmatprep.subr.mxu0 0.0
      %639 = vmatpush1.msra.mxu0 0.0
      %640 = vmatprep.subr.mxu0 0.0
      %641 = vmatpush1.msra.mxu0 0.0
      %642 = vmatprep.subr.mxu0 0.0
      %643 = vmatpush1.msra.mxu0 0.0
      %644 = vmatprep.subr.mxu0 0.0
      %645 = vmatpush1.msra.mxu0 0.0
      %646 = vmatprep.subr.mxu0 0.0
      %647 = vmatpush1.msra.mxu0 0.0
      %648 = vmatprep.subr.mxu0 0.0
      %649 = vmatpush1.msra.mxu0 0.0
      %650 = vmatprep.subr.mxu0 0.0
      %651 = vmatpush1.msra.mxu0 0.0
      %652 = vmatprep.mubr.f32.mxu0 0.0
      %653 = vmatmul.mubr.f32.gmra.mrb[0].mxu0 %v572
      %v654 = vpop.f32.mrb[0].mxu0
      %v655 = vadd.f32 %v249, %v654
      %v656 = vpop.f32.mrb[0].mxu0
      %v657 = vadd.f32 %v250, %v656
      %658 = vmatprep.mubr.f32.mxu0 0.0
      %659 = vmatmul.mubr.f32.gmra.mrb[0].mxu0 %v573
      %v660 = vpop.f32.mrb[0].mxu0
      %v661 = vadd.f32 %v251, %v660
      %v662 = vpop.f32.mrb[0].mxu0
      %v663 = vadd.f32 %v252, %v662
      %664 = vmatprep.mubr.f32.mxu0 0.0
      %665 = vmatmul.mubr.f32.gmra.mrb[0].mxu0 %v574
      %v666 = vpop.f32.mrb[0].mxu0
      %v667 = vadd.f32 %v253, %v666
      %v668 = vpop.f32.mrb[0].mxu0
      %v669 = vadd.f32 %v254, %v668
      %670 = vmatprep.mubr.f32.mxu0 0.0
      %671 = vmatmul.mubr.f32.gmra.mrb[0].mxu0 %v575
      %v672 = vpop.f32.mrb[0].mxu0
      %v673 = vadd.f32 %v255, %v672
      %v674 = vpop.f32.mrb[0].mxu0
      %v675 = vadd.f32 %v256, %v674
      %676 = vmatprep.mubr.f32.mxu0 0.0
      %677 = vmatmul.mubr.f32.gmra.mrb[0].mxu0 %v576
      %v678 = vpop.f32.mrb[0].mxu0
      %v679 = vadd.f32 %v257, %v678
      %v680 = vpop.f32.mrb[0].mxu0
      %v681 = vadd.f32 %v258, %v680
      %682 = vmatprep.mubr.f32.mxu0 0.0
      %683 = vmatmul.mubr.f32.gmra.mrb[0].mxu0 %v577
      %v684 = vpop.f32.mrb[0].mxu0
      %v685 = vadd.f32 %v259, %v684
      %v686 = vpop.f32.mrb[0].mxu0
      %v687 = vadd.f32 %v260, %v686
      %688 = vmatprep.mubr.f32.mxu0 0.0
      %689 = vmatmul.mubr.f32.gmra.mrb[0].mxu0 %v578
      %v690 = vpop.f32.mrb[0].mxu0
      %v691 = vadd.f32 %v261, %v690
      %v692 = vpop.f32.mrb[0].mxu0
      %v693 = vadd.f32 %v262, %v692
      %694 = vmatprep.mubr.f32.mxu0 0.0
      %695 = vmatmul.mubr.f32.gmra.mrb[0].mxu0 %v579
      %v696 = vpop.f32.mrb[0].mxu0
      %v697 = vadd.f32 %v263, %v696
      %v698 = vpop.f32.mrb[0].mxu0
      %v699 = vadd.f32 %v264, %v698
      %700 = vmatprep.mubr.f32.mxu0 0.0
      %701 = vmatmul.mubr.f32.gmra.mrb[0].mxu0 %v580
      %v702 = vpop.f32.mrb[0].mxu0
      %v703 = vadd.f32 %v265, %v702
      %v704 = vpop.f32.mrb[0].mxu0
      %v705 = vadd.f32 %v266, %v704
      %706 = vmatprep.mubr.f32.mxu0 0.0
      %707 = vmatmul.mubr.f32.gmra.mrb[0].mxu0 %v581
      %v708 = vpop.f32.mrb[0].mxu0
      %v709 = vadd.f32 %v267, %v708
      %v710 = vpop.f32.mrb[0].mxu0
      %v711 = vadd.f32 %v268, %v710
      %712 = vmatprep.mubr.f32.mxu0 0.0
      %713 = vmatmul.mubr.f32.gmra.mrb[0].mxu0 %v582
      %v714 = vpop.f32.mrb[0].mxu0
      %v715 = vadd.f32 %v269, %v714
      %v716 = vpop.f32.mrb[0].mxu0
      %v717 = vadd.f32 %v270, %v716
      %718 = vmatprep.mubr.f32.mxu0 0.0
      %719 = vmatmul.mubr.f32.gmra.mrb[0].mxu0 %v583
      %v720 = vpop.f32.mrb[0].mxu0
      %v721 = vadd.f32 %v271, %v720
      %v722 = vpop.f32.mrb[0].mxu0
      %v723 = vadd.f32 %v272, %v722
      %724 = vmatprep.mubr.f32.mxu0 0.0
      %725 = vmatmul.mubr.f32.gmra.mrb[0].mxu0 %v584
      %v726 = vpop.f32.mrb[0].mxu0
      %v727 = vadd.f32 %v273, %v726
      %v728 = vpop.f32.mrb[0].mxu0
      %v729 = vadd.f32 %v274, %v728
      %730 = vmatprep.mubr.f32.mxu0 0.0
      %731 = vmatmul.mubr.f32.gmra.mrb[0].mxu0 %v585
      %v732 = vpop.f32.mrb[0].mxu0
      %v733 = vadd.f32 %v275, %v732
      %v734 = vpop.f32.mrb[0].mxu0
      %v735 = vadd.f32 %v276, %v734
      %736 = vmatprep.mubr.f32.mxu0 0.0
      %737 = vmatmul.mubr.f32.gmra.mrb[0].mxu0 %v586
      %v738 = vpop.f32.mrb[0].mxu0
      %v739 = vadd.f32 %v277, %v738
      %v740 = vpop.f32.mrb[0].mxu0
      %v741 = vadd.f32 %v278, %v740
      %742 = vmatprep.mubr.f32.mxu0 0.0
      %743 = vmatmul.mubr.f32.gmra.mrb[0].mxu0 %v587
      %v744 = vpop.f32.mrb[0].mxu0
      %v745 = vadd.f32 %v279, %v744
      %v746 = vpop.f32.mrb[0].mxu0
      %v747 = vadd.f32 %v280, %v746
      %748 = vdwg.mxu0
      %749 = vst [vmem:[%s215] sm:$0xff] %v655
      %750 = vst [vmem:[%s215 + $0x8] sm:$0xff] %v657
      %751 = vst [vmem:[%s215 + $0x10] sm:$0xff] %v661
      %752 = vst [vmem:[%s215 + $0x18] sm:$0xff] %v663
      %753 = vst [vmem:[%s215 + $0x20] sm:$0xff] %v667
      %754 = vst [vmem:[%s215 + $0x28] sm:$0xff] %v669
      %755 = vst [vmem:[%s215 + $0x30] sm:$0xff] %v673
      %756 = vst [vmem:[%s215 + $0x38] sm:$0xff] %v675
      %757 = vst [vmem:[%s215 + $0x40] sm:$0xff] %v679
      %758 = vst [vmem:[%s215 + $0x48] sm:$0xff] %v681
      %759 = vst [vmem:[%s215 + $0x50] sm:$0xff] %v685
      %760 = vst [vmem:[%s215 + $0x58] sm:$0xff] %v687
      %761 = vst [vmem:[%s215 + $0x60] sm:$0xff] %v691
      %762 = vst [vmem:[%s215 + $0x68] sm:$0xff] %v693
      %763 = vst [vmem:[%s215 + $0x70] sm:$0xff] %v697
      %764 = vst [vmem:[%s215 + $0x78] sm:$0xff] %v699
      %765 = vst [vmem:[%s215 + $0x80] sm:$0xff] %v703
      %766 = vst [vmem:[%s215 + $0x88] sm:$0xff] %v705
      %767 = vst [vmem:[%s215 + $0x90] sm:$0xff] %v709
      %768 = vst [vmem:[%s215 + $0x98] sm:$0xff] %v711
      %769 = vst [vmem:[%s215 + $0xa0] sm:$0xff] %v715
      %770 = vst [vmem:[%s215 + $0xa8] sm:$0xff] %v717
      %771 = vst [vmem:[%s215 + $0xb0] sm:$0xff] %v721
      %772 = vst [vmem:[%s215 + $0xb8] sm:$0xff] %v723
      %773 = vst [vmem:[%s215 + $0xc0] sm:$0xff] %v727
      %774 = vst [vmem:[%s215 + $0xc8] sm:$0xff] %v729
      %775 = vst [vmem:[%s215 + $0xd0] sm:$0xff] %v733
      %776 = vst [vmem:[%s215 + $0xd8] sm:$0xff] %v735
      %777 = vst [vmem:[%s215 + $0xe0] sm:$0xff] %v739
      %778 = vst [vmem:[%s215 + $0xe8] sm:$0xff] %v741
      %779 = vst [vmem:[%s215 + $0xf0] sm:$0xff] %v745
      %780 = vst [vmem:[%s215 + $0xf8] sm:$0xff] %v747
      %s781 = smul.u32 16, %s20
      %p782 = scmp.lt.s32.totalorder %s19, 1
      %s783 = scalar_select %p782, %s19, 1
      %p784 = scmp.lt.s32.totalorder %s781, 15
      %s785 = scalar_select %p784, %s781, 15
      %s786 = smul.addr %s785, 2
      %s787 = smul.addr %s783, 32
      %s788 = sadd.s32 %s786, %s787
      %s789 = smul.addr %s788, 8
      %s790 = scalar_lea.vmem %s3, %s789
      // Predicated region
      $region33: #{coam_forward.1} parent=31 // pred_check
        %p791 = pneg %p120
      $region34: #{coam_forward.1} parent=31 // pred_check_branch
        %793 = sbr.rel (%p791) target = $region36
      $region35: #{coam_forward.1} parent=31 // pred_region
        %s794 = smul.u32 16, %s20
      $region36: #{coam_forward.1} parent=31 // pred_fallthru
        _
    $region32: #{coam_forward.1} parent=5 // pred_fallthru
      _
    %p795 = scmp.le.s32.totalorder 2, %s10
    // Predicated region
    $region37: #{coam_forward.1} parent=5 // pred_check
      %p796 = pneg %p795
    $region38: #{coam_forward.1} parent=5 // pred_check_branch
      %798 = sbr.rel (%p796) target = $region40
    $region39: #{coam_forward.1} parent=5 // pred_region
      %s799 = ssub.s32 %s10, 2
      // Predicated region
      $region41: #{coam_forward.1} parent=39 // pred_check
        %p800 = pneg %p126
      $region42: #{coam_forward.1} parent=39 // pred_check_branch
        %802 = sbr.rel (%p800) target = $region44
      $region43: #{coam_forward.1} parent=39 // pred_region
        %s803 = smul.u32 16, %s22
        %p804 = scmp.lt.s32.totalorder %s21, 1
        %s805 = scalar_select %p804, %s21, 1
        %p806 = scmp.lt.s32.totalorder %s803, 15
        %s807 = scalar_select %p806, %s803, 15
        %s808 = smul.addr %s807, 2
        %s809 = smul.addr %s805, 32
        %s810 = sadd.s32 %s808, %s809
        %s811 = smul.addr %s810, 8
        %s812 = scalar_lea.vmem %s3, %s811
      $region44: #{coam_forward.1} parent=39 // pred_fallthru
        _
    $region40: #{coam_forward.1} parent=5 // pred_fallthru
      _
  $region6: #{coam_forward.1} parent=0 // loop_footer
    %s14 = sadd.s32 1, %s10
  $region7: #{coam_forward.1} parent=0 // loop_footer_branch
    %9 = sbr.rel target = $region3
  $region8: #{coam_forward.1} parent=0 // loop_exit
    _

</llo_original>
